<compile_context>
chip_gen: v6e
topology: v6e:2x2x1
jax: 0.10.0
libtpu: 0.0.40
codegen_flags: <defaults>
</compile_context>

<pallas_src>
import functools

import jax
import jax.numpy as jnp
from jax import lax
from jax.experimental import pallas as pl
from jax.experimental.pallas import tpu as pltpu

_MIB = 1024 * 1024


def _round_up(x, m):
    return ((x + m - 1) // m) * m


def _vmem_limit_bytes():
    """Generation-aware scoped-VMEM limit (v5e/v6e: 128 MiB phys, v7x: 64 MiB)."""
    cap = 64 * _MIB
    try:
        info = pltpu.get_tpu_info()
        cap = int(getattr(info, "vmem_capacity_bytes", cap))
    except Exception:
        pass
    return int(max(min(cap // 2, 64 * _MIB), 16 * _MIB))


# ---------------------------------------------------------------------------
# Lane-dense kernel: logits laid out as (C, tn) -> classes on sublanes, tokens on lanes.
# Grid = (P shards ["parallel"], tiles-per-shard ["arbitrary"]).
# ---------------------------------------------------------------------------
def _gce_kernel_lane(logits_ref, targets_ref, sum_ref, cnt_ref, *, q, ignore_index):
    j = pl.program_id(1)

    @pl.when(j == 0)
    def _():
        sum_ref[...] = jnp.zeros_like(sum_ref)
        cnt_ref[...] = jnp.zeros_like(cnt_ref)

    x = logits_ref[...].astype(jnp.float32)           # (C, tn)
    t = targets_ref[...]                              # (1, tn) int32
    valid = t != ignore_index                         # (1, tn)
    t_safe = jnp.where(valid, t, 0)

    c, tn = x.shape
    class_ids = lax.broadcasted_iota(jnp.int32, (c, tn), 0)
    onehot = (class_ids == t_safe).astype(jnp.float32)   # (C, tn)

    # stable softmax gather in log space:  p_t^q = exp(q*(x_t - m - log(sum exp(x-m))))
    m = jnp.max(x, axis=0, keepdims=True)                         # (1, tn)
    denom = jnp.sum(jnp.exp(x - m), axis=0, keepdims=True)        # (1, tn)
    x_t = jnp.sum(x * onehot, axis=0, keepdims=True)              # (1, tn)
    p_q = jnp.exp(q * (x_t - m - jnp.log(denom)))                 # (1, tn)

    # Note: a target outside [0, C) (and != ignore_index) gives p_t=0 -> loss 1/q and is
    # counted as valid; PyTorch would raise instead.
    loss = jnp.where(valid, (1.0 - p_q) * (1.0 / q), 0.0)

    sum_ref[...] += jnp.sum(loss)                                  # broadcast scalar into (1,128)
    cnt_ref[...] += jnp.sum(valid.astype(jnp.float32))


def _gce_lane_dense(logits, targets, q, ignore_index, budget, vmem_limit):
    N, C = logits.shape
    c8 = _round_up(C, 8)
    # double-buffered logits tile (c8 x tn) + targets tile (8-sublane padded x tn), f32/i32
    tn_max = budget // (2 * 4 * (c8 + 8))
    tn_max = max(128, (tn_max // 128) * 128)
    tn_max = min(tn_max, 16384)
    tn = min(tn_max, _round_up(N, 128))
    Np = _round_up(N, tn)

    targets = targets.astype(jnp.int32)
    if Np != N:
        logits = jnp.pad(logits, ((0, Np - N), (0, 0)))
        targets = jnp.pad(targets, (0, Np - N), constant_values=ignore_index)

    logits_t = logits.T                          # (C, Np): tokens on the lane axis
    targets2d = targets.reshape(1, Np)

    tiles = Np // tn
    P = 2 if (tiles >= 2 and tiles % 2 == 0) else 1   # shard rows across v7x's 2 TensorCores
    tps = tiles // P

    kernel = functools.partial(_gce_kernel_lane, q=float(q), ignore_index=int(ignore_index))
    sums, cnts = pl.pallas_call(
        kernel,
        out_shape=(
            jax.ShapeDtypeStruct((1, P * 128), jnp.float32),
            jax.ShapeDtypeStruct((1, P * 128), jnp.float32),
        ),
        grid_spec=pltpu.PrefetchScalarGridSpec(
            num_scalar_prefetch=0,
            grid=(P, tps),
            in_specs=[
                pl.BlockSpec((C, tn), lambda p, j: (0, p * tps + j)),
                pl.BlockSpec((1, tn), lambda p, j: (0, p * tps + j)),
            ],
            out_specs=(
                pl.BlockSpec((1, 128), lambda p, j: (0, p)),
                pl.BlockSpec((1, 128), lambda p, j: (0, p)),
            ),
        ),
        compiler_params=pltpu.CompilerParams(
            dimension_semantics=("parallel", "arbitrary"),
            vmem_limit_bytes=int(vmem_limit),
        ),
    )(logits_t, targets2d)

    # each shard broadcast-wrote its partial scalar across its 128 lanes; take lane 0
    partial_sum = sums.reshape(P, 128)[:, 0]
    partial_cnt = cnts.reshape(P, 128)[:, 0]
    return jnp.sum(partial_sum), jnp.sum(partial_cnt)


# ---------------------------------------------------------------------------
# Row-tiled fallback for large C: logits (tm, C), softmax over the lane (class) axis.
# ---------------------------------------------------------------------------
def _gce_kernel_row(logits_ref, targets_ref, sum_ref, cnt_ref, *, q, ignore_index):
    i = pl.program_id(0)

    @pl.when(i == 0)
    def _():
        sum_ref[...] = jnp.zeros_like(sum_ref)
        cnt_ref[...] = jnp.zeros_like(cnt_ref)

    x = logits_ref[...].astype(jnp.float32)           # (tm, C)
    t = targets_ref[...]                              # (tm, 1) int32
    valid = t != ignore_index
    t_safe = jnp.where(valid, t, 0)

    tm, c = x.shape
    class_ids = lax.broadcasted_iota(jnp.int32, (tm, c), 1)
    onehot = (class_ids == t_safe).astype(jnp.float32)

    m = jnp.max(x, axis=-1, keepdims=True)
    denom = jnp.sum(jnp.exp(x - m), axis=-1, keepdims=True)
    x_t = jnp.sum(x * onehot, axis=-1, keepdims=True)
    p_q = jnp.exp(q * (x_t - m - jnp.log(denom)))
    loss = jnp.where(valid, (1.0 - p_q) * (1.0 / q), 0.0)

    sum_ref[...] += jnp.sum(loss)
    cnt_ref[...] += jnp.sum(valid.astype(jnp.float32))


def _gce_row_tiled(logits, targets, q, ignore_index, budget, vmem_limit):
    N, C = logits.shape
    # double-buffered logits tile (tm x C) + lane-padded targets tile (tm x 128), f32/i32
    tm_max = budget // (2 * 4 * (C + 128))
    tm_max = max(8, (tm_max // 8) * 8)
    tm_max = min(tm_max, 2048)
    tm = min(tm_max, _round_up(N, 8))
    Np = _round_up(N, tm)

    targets = targets.astype(jnp.int32)
    if Np != N:
        logits = jnp.pad(logits, ((0, Np - N), (0, 0)))
        targets = jnp.pad(targets, (0, Np - N), constant_values=ignore_index)
    targets2d = targets.reshape(Np, 1)

    kernel = functools.partial(_gce_kernel_row, q=float(q), ignore_index=int(ignore_index))
    sums, cnts = pl.pallas_call(
        kernel,
        out_shape=(
            jax.ShapeDtypeStruct((1, 128), jnp.float32),
            jax.ShapeDtypeStruct((1, 128), jnp.float32),
        ),
        grid_spec=pltpu.PrefetchScalarGridSpec(
            num_scalar_prefetch=0,
            grid=(Np // tm,),
            in_specs=[
                pl.BlockSpec((tm, C), lambda i: (i, 0)),
                pl.BlockSpec((tm, 1), lambda i: (i, 0)),
            ],
            out_specs=(
                pl.BlockSpec((1, 128), lambda i: (0, 0)),
                pl.BlockSpec((1, 128), lambda i: (0, 0)),
            ),
        ),
        compiler_params=pltpu.CompilerParams(
            dimension_semantics=("arbitrary",),
            vmem_limit_bytes=int(vmem_limit),
        ),
    )(logits, targets2d)

    return sums[0, 0], cnts[0, 0]


# ---------------------------------------------------------------------------
# Public wrapper (matches GCELoss.forward semantics for the q > 0, weight=None case).
# ---------------------------------------------------------------------------
def gce_loss(logits, targets, *, q=0.7, ignore_index=-100, reduction="mean"):
    """GCE loss forward. logits: [N, C] float, targets: [N] int."""
    # TODO(synk): q == 0 (plain CE / BCE-with-logits), logits.size(-1)==1 (sigmoid/binary),
    # per-class `weight`, and reduction='none' (dynamically-shaped valid-only output) are
    # not lowered here.
    assert q > 0, "kernel implements the q > 0 GCE path"
    if reduction not in ("mean", "sum"):
        raise NotImplementedError(reduction)

    N, C = logits.shape
    vmem_limit = _vmem_limit_bytes()
    budget = (vmem_limit * 2) // 5          # ~40% of scoped limit for double-buffered tiles

    if C <= 2048:
        total, count = _gce_lane_dense(logits, targets, q, ignore_index, budget, vmem_limit)
    else:
        # TODO(synk): class-axis grid with online softmax for vocab-sized C.
        total, count = _gce_row_tiled(logits, targets, q, ignore_index, budget, vmem_limit)

    if reduction == "mean":
        return total / count                # NaN if no valid targets (torch.mean of empty)
    return total


# ---------------------------------------------------------------------------
# Pure-JAX reference + self test
# ---------------------------------------------------------------------------
def _gce_ref(logits, targets, q=0.7, ignore_index=-100, reduction="mean"):
    valid = targets != ignore_index
    t_safe = jnp.where(valid, targets, 0)
    p = jax.nn.softmax(logits.astype(jnp.float32), axis=-1)
    p_t = jnp.take_along_axis(p, t_safe[:, None], axis=-1)[:, 0]
    loss = (1.0 - jnp.power(p_t, q)) / q
    loss = jnp.where(valid, loss, 0.0)
    if reduction == "mean":
        return jnp.sum(loss) / jnp.sum(valid.astype(jnp.float32))
    return jnp.sum(loss)


if __name__ == "__main__":
    key = jax.random.PRNGKey(0)
    k1, k2 = jax.random.split(key)

    # Small-C (lane-dense) path: 64 tokens, 8 classes, every 7th token ignored.
    N, C = 64, 8
    logits = jax.random.normal(k1, (N, C), dtype=jnp.float32)
    targets = jax.random.randint(k2, (N,), 0, C, dtype=jnp.int32)
    targets = jnp.where(jnp.arange(N) % 7 == 0, -100, targets)

    out = gce_loss(logits, targets, q=0.7, ignore_index=-100, reduction="mean")
    out = jax.block_until_ready(out)
    ref = _gce_ref(logits, targets, q=0.7, ignore_index=-100, reduction="mean")
    assert jnp.allclose(out, ref, rtol=1e-5, atol=1e-6), (out, ref)

    # Large-C (row-tiled fallback) path: 48 tokens, 4096 classes, sum reduction.
    N2, C2 = 48, 4096
    k3, k4 = jax.random.split(k2)
    logits2 = jax.random.normal(k3, (N2, C2), dtype=jnp.float32)
    targets2 = jax.random.randint(k4, (N2,), 0, C2, dtype=jnp.int32)
    targets2 = jnp.where(jnp.arange(N2) % 5 == 0, -100, targets2)

    out2 = jax.block_until_ready(
        gce_loss(logits2, targets2, q=0.7, ignore_index=-100, reduction="sum"))
    ref2 = _gce_ref(logits2, targets2, q=0.7, ignore_index=-100, reduction="sum")
    assert jnp.allclose(out2, ref2, rtol=1e-5, atol=1e-4), (out2, ref2)

    print("KERNEL_OK")
</pallas_src>

<mosaic_0001>
module attributes {stable_mosaic.version = 11 : i64} {
  func.func @_gce_kernel_lane(%arg0: i32, %arg1: i32, %arg2: memref<8x128xf32, #tpu.memory_space<vmem>>, %arg3: memref<1x128xi32, #tpu.memory_space<vmem>>, %arg4: memref<1x128xf32, #tpu.memory_space<vmem>>, %arg5: memref<1x128xf32, #tpu.memory_space<vmem>>) attributes {dimension_semantics = [#tpu.dimension_semantics<parallel>, #tpu.dimension_semantics<arbitrary>], iteration_bounds = array<i64: 1, 1>, scalar_prefetch = 0 : i64, scratch_operands = 0 : i64, tpu.core_type = #tpu.core_type<tc>, window_params = [{transform_indices = @transform_0, window_bounds = array<i64: 8, 128>}, {transform_indices = @transform_1, window_bounds = array<i64: 1, 128>}, {transform_indices = @transform_2, window_bounds = array<i64: 1, 128>}, {transform_indices = @transform_3, window_bounds = array<i64: 1, 128>}]} {
    %c0_i32 = arith.constant 0 : i32
    %0 = arith.cmpi eq, %arg1, %c0_i32 : i32
    %1 = arith.extui %0 : i1 to i32
    %c0_i32_0 = arith.constant 0 : i32
    %2 = arith.cmpi ne, %1, %c0_i32_0 : i32
    scf.if %2 {
      %cst_21 = arith.constant 0.000000e+00 : f32
      %54 = vector.broadcast %cst_21 : f32 to vector<1x128xf32>
      %c0_22 = arith.constant 0 : index
      %c0_23 = arith.constant 0 : index
      %55 = vector.load %arg4[%c0_22, %c0_23] : memref<1x128xf32, #tpu.memory_space<vmem>>, vector<1x128xf32>
      tpu.vector_store %arg4[%c0_22, %c0_23], %54 {strides = array<i32>} : memref<1x128xf32, #tpu.memory_space<vmem>>, vector<1x128xf32>,
      %cst_24 = arith.constant 0.000000e+00 : f32
      %56 = vector.broadcast %cst_24 : f32 to vector<1x128xf32>
      %c0_25 = arith.constant 0 : index
      %c0_26 = arith.constant 0 : index
      %57 = vector.load %arg5[%c0_25, %c0_26] : memref<1x128xf32, #tpu.memory_space<vmem>>, vector<1x128xf32>
      tpu.vector_store %arg5[%c0_25, %c0_26], %56 {strides = array<i32>} : memref<1x128xf32, #tpu.memory_space<vmem>>, vector<1x128xf32>,
    } else {
    }
    %c0 = arith.constant 0 : index
    %c0_1 = arith.constant 0 : index
    %3 = vector.load %arg2[%c0, %c0_1] : memref<8x128xf32, #tpu.memory_space<vmem>>, vector<8x128xf32>
    %c0_2 = arith.constant 0 : index
    %c0_3 = arith.constant 0 : index
    %4 = vector.load %arg3[%c0_2, %c0_3] : memref<1x128xi32, #tpu.memory_space<vmem>>, vector<1x128xi32>
    %c-100_i32 = arith.constant -100 : i32
    %5 = vector.broadcast %c-100_i32 : i32 to vector<1x128xi32>
    %6 = arith.cmpi ne, %4, %5 : vector<1x128xi32>
    %c0_i32_4 = arith.constant 0 : i32
    %7 = vector.broadcast %c0_i32_4 : i32 to vector<1x128xi32>
    %8 = arith.select %6, %4, %7 : vector<1x128xi1>, vector<1x128xi32>
    %9 = tpu.iota {dimensions = array<i32: 0>} : vector<8x128xi32>
    %10 = vector.broadcast %8 : vector<1x128xi32> to vector<8x128xi32>
    %11 = arith.cmpi eq, %9, %10 : vector<8x128xi32>
    %12 = arith.extui %11 : vector<8x128xi1> to vector<8x128xi32>
    %13 = arith.sitofp %12 : vector<8x128xi32> to vector<8x128xf32>
    %cst = arith.constant dense<0xFF800000> : vector<128xf32>
    %14 = vector.multi_reduction <maximumf>, %3, %cst [0] : vector<8x128xf32> to vector<128xf32>
    %15 = vector.shape_cast %14 : vector<128xf32> to vector<1x128xf32>
    %16 = vector.broadcast %15 : vector<1x128xf32> to vector<8x128xf32>
    %17 = arith.subf %3, %16 : vector<8x128xf32>
    %18 = math.exp %17 : vector<8x128xf32>
    %cst_5 = arith.constant dense<0.000000e+00> : vector<128xf32>
    %19 = vector.multi_reduction <add>, %18, %cst_5 [0] : vector<8x128xf32> to vector<128xf32>
    %20 = vector.shape_cast %19 : vector<128xf32> to vector<1x128xf32>
    %21 = arith.mulf %3, %13 : vector<8x128xf32>
    %cst_6 = arith.constant dense<0.000000e+00> : vector<128xf32>
    %22 = vector.multi_reduction <add>, %21, %cst_6 [0] : vector<8x128xf32> to vector<128xf32>
    %23 = vector.shape_cast %22 : vector<128xf32> to vector<1x128xf32>
    %24 = arith.subf %23, %15 : vector<1x128xf32>
    %25 = math.log %20 : vector<1x128xf32>
    %26 = arith.subf %24, %25 : vector<1x128xf32>
    %cst_7 = arith.constant 0.699999988 : f32
    %27 = vector.broadcast %cst_7 : f32 to vector<1x128xf32>
    %28 = arith.mulf %27, %26 : vector<1x128xf32>
    %29 = math.exp %28 : vector<1x128xf32>
    %cst_8 = arith.constant 1.000000e+00 : f32
    %30 = vector.broadcast %cst_8 : f32 to vector<1x128xf32>
    %31 = arith.subf %30, %29 : vector<1x128xf32>
    %cst_9 = arith.constant 1.42857146 : f32
    %32 = vector.broadcast %cst_9 : f32 to vector<1x128xf32>
    %33 = arith.mulf %31, %32 : vector<1x128xf32>
    %cst_10 = arith.constant 0.000000e+00 : f32
    %34 = vector.broadcast %cst_10 : f32 to vector<1x128xf32>
    %35 = arith.select %6, %33, %34 : vector<1x128xi1>, vector<1x128xf32>
    %c0_11 = arith.constant 0 : index
    %c0_12 = arith.constant 0 : index
    %36 = vector.load %arg4[%c0_11, %c0_12] : memref<1x128xf32, #tpu.memory_space<vmem>>, vector<1x128xf32>
    %37 = vector.shape_cast %35 : vector<1x128xf32> to vector<1x1x128xf32>
    %cst_13 = arith.constant dense<0.000000e+00> : vector<1xf32>
    %38 = vector.multi_reduction <add>, %37, %cst_13 [1, 2] : vector<1x1x128xf32> to vector<1xf32>
    %39 = vector.shape_cast %38 : vector<1xf32> to vector<1x1x1xf32>
    %40 = vector.extract %39[0, 0, 0] : f32 from vector<1x1x1xf32>
    %41 = vector.broadcast %40 : f32 to vector<1x128xf32>
    %42 = arith.addf %36, %41 : vector<1x128xf32>
    %c0_14 = arith.constant 0 : index
    %c0_15 = arith.constant 0 : index
    %43 = vector.load %arg4[%c0_14, %c0_15] : memref<1x128xf32, #tpu.memory_space<vmem>>, vector<1x128xf32>
    tpu.vector_store %arg4[%c0_14, %c0_15], %42 {strides = array<i32>} : memref<1x128xf32, #tpu.memory_space<vmem>>, vector<1x128xf32>,
    %c0_16 = arith.constant 0 : index
    %c0_17 = arith.constant 0 : index
    %44 = vector.load %arg5[%c0_16, %c0_17] : memref<1x128xf32, #tpu.memory_space<vmem>>, vector<1x128xf32>
    %45 = arith.extui %6 : vector<1x128xi1> to vector<1x128xi32>
    %46 = arith.sitofp %45 : vector<1x128xi32> to vector<1x128xf32>
    %47 = vector.shape_cast %46 : vector<1x128xf32> to vector<1x1x128xf32>
    %cst_18 = arith.constant dense<0.000000e+00> : vector<1xf32>
    %48 = vector.multi_reduction <add>, %47, %cst_18 [1, 2] : vector<1x1x128xf32> to vector<1xf32>
    %49 = vector.shape_cast %48 : vector<1xf32> to vector<1x1x1xf32>
    %50 = vector.extract %49[0, 0, 0] : f32 from vector<1x1x1xf32>
    %51 = vector.broadcast %50 : f32 to vector<1x128xf32>
    %52 = arith.addf %44, %51 : vector<1x128xf32>
    %c0_19 = arith.constant 0 : index
    %c0_20 = arith.constant 0 : index
    %53 = vector.load %arg5[%c0_19, %c0_20] : memref<1x128xf32, #tpu.memory_space<vmem>>, vector<1x128xf32>
    tpu.vector_store %arg5[%c0_19, %c0_20], %52 {strides = array<i32>} : memref<1x128xf32, #tpu.memory_space<vmem>>, vector<1x128xf32>,
    return
  }
  func.func @transform_0(%arg0: i32, %arg1: i32) -> (i32, i32) {
    %c1_i32 = arith.constant 1 : i32
    %0 = arith.muli %arg0, %c1_i32 : i32
    %1 = arith.addi %0, %arg1 : i32
    %c0_i32 = arith.constant 0 : i32
    %c0_i32_0 = arith.constant 0 : i32
    return %c0_i32, %1 : i32, i32
  }
  func.func @transform_1(%arg0: i32, %arg1: i32) -> (i32, i32) {
    %c1_i32 = arith.constant 1 : i32
    %0 = arith.muli %arg0, %c1_i32 : i32
    %1 = arith.addi %0, %arg1 : i32
    %c0_i32 = arith.constant 0 : i32
    %c0_i32_0 = arith.constant 0 : i32
    return %c0_i32, %1 : i32, i32
  }
  func.func @transform_2(%arg0: i32, %arg1: i32) -> (i32, i32) {
    %c0_i32 = arith.constant 0 : i32
    %c0_i32_0 = arith.constant 0 : i32
    return %c0_i32, %arg0 : i32, i32
  }
  func.func @transform_3(%arg0: i32, %arg1: i32) -> (i32, i32) {
    %c0_i32 = arith.constant 0 : i32
    %c0_i32_0 = arith.constant 0 : i32
    return %c0_i32, %arg0 : i32, i32
  }
}

</mosaic_0001>

<llo_original>
// kernel: tpu_custom_call.1
$region0: #{tpu_custom_call.1}
  #allocation0 [shape = 'u32[]', space=smem, size = 0x4, offset = 0x4, fixed_abs, tag = 'smem constant byte address 0x4 - core index']
  #allocation1 [shape = 'u32[144,128]{1,0:T(1,128)}', space=vmem, size = 0x12000, scoped, tag = 'internal scratch']
  %s0 = inlined_call_operand.hbm [shape: f32[8,128], index: 0, kind: input, shape index: {}]
  %s1 = inlined_call_operand.vmem [shape: s32[1,128], index: 1, kind: input, shape index: {}]
  %s2 = inlined_call_operand.hbm [shape: f32[1,128], index: 2, kind: output, shape index: {0}]
  %s3 = inlined_call_operand.hbm [shape: f32[1,128], index: 3, kind: output, shape index: {1}]
  %4 = xla_tuple %s2, %s3
  %s5 = sld [smem:[#allocation0]]
  $region34: #{tpu_custom_call.1} parent=0
    _
  %s7 = ssub.s32 1, %s5
  %s8 = scalar_select 0, %s7, %s5
  $region1: #{tpu_custom_call.1} parent=0
    #allocation2 [shape = 'u8[4096]{0}', space=vmem, size = 0x1000, scoped, tag = 'input window, operand 0, single buffered']
    #allocation3 [shape = 's32[1]{0}', space=sflag, size = 0x4, scoped, tag = 'scoped memory for tpu_custom_call.1']
    #allocation4 [shape = 's32[1]{0}', space=sflag, size = 0x4, scoped, tag = 'scoped memory for tpu_custom_call.1']
    #allocation5 [shape = 'u8[512]{0}', space=vmem, size = 0x400, scoped, tag = 'output window, operand 0, single buffered']
    #allocation6 [shape = 'u8[512]{0}', space=vmem, size = 0x400, scoped, tag = 'output window, operand 1, single buffered']
    #allocation7 [shape = 's32[1]{0}', space=sflag, size = 0x4, scoped, tag = 'scoped memory for tpu_custom_call.1']
    %9 = vsyncpa [#allocation3], 0
    %10 = vsyncpa [#allocation4], 0
    %11 = vsyncpa [#allocation7], 0
    // Predicated region
    $region2: #{tpu_custom_call.1} parent=1 // pred_check
      _
    $region3: #{tpu_custom_call.1} parent=1 // pred_check_branch
      %13 = sbr.rel (0) target = $region5
    $region4: #{tpu_custom_call.1} parent=1 // pred_region
      %s14 = sadd.s32 0, 0
      %s16 = ssub.s32 128, 128
      %17 = vsyncadd [#allocation3], %s16
      %s18 = smul.addr %s14, 128
      %s19 = scalar_lea.hbm %s0, %s18
      %s21 = sshll.u32 [#allocation2], 4
      %s22 = int_to_ptr.vmem [resolvable:$true] %s21
      %24 = dma.hbm_to_vmem [thread:$0]  %s19, 128, %s22, [#allocation3]
    $region5: #{tpu_custom_call.1} parent=1 // pred_fallthru
      _
    // Predicated region
    $region6: #{tpu_custom_call.1} parent=1 // pred_check
      _
    $region7: #{tpu_custom_call.1} parent=1 // pred_check_branch
      %26 = sbr.rel (0) target = $region9
    $region8: #{tpu_custom_call.1} parent=1 // pred_region
      %s27 = sadd.s32 0, 0
      %p28 = scmp.lt.s32.totalorder %s27, 0
      %s29 = scalar_select %p28, %s27, 0
      %s30 = scalar_lea.vmem %s1, %s29
      %s31 = sadd.s32 0, 0
    $region9: #{tpu_custom_call.1} parent=1 // pred_fallthru
      _
    // Predicated region
    $region10: #{tpu_custom_call.1} parent=1 // pred_check
      _
    $region11: #{tpu_custom_call.1} parent=1 // pred_check_branch
      %33 = sbr.rel (0) target = $region13
    $region12: #{tpu_custom_call.1} parent=1 // pred_region
      %34 = dma.done [#allocation3], 128
    $region13: #{tpu_custom_call.1} parent=1 // pred_fallthru
      _
    %s35 = sadd.s32 0, 0
    %p36 = scmp.lt.s32.totalorder %s35, 0
    %s37 = scalar_select %p36, %s35, 0
    %s38 = scalar_lea.vmem %s1, %s37
    %s39 = sadd.s32 0, 0
    %s40 = sadd.s32 0, 0
    %p41 = scmp.lt.s32.totalorder %s40, 0
    %s42 = scalar_select %p41, %s40, 0
    %s43 = scalar_lea.vmem %s1, %s42
    %s44 = sadd.s32 0, 0
    %p45 = scmp.eq.s32.totalorder 0, 0
    // Predicated region
    $region14: #{tpu_custom_call.1} parent=1 // pred_check
      %p46 = pneg %p45
    $region15: #{tpu_custom_call.1} parent=1 // pred_check_branch
      %48 = sbr.rel (%p46) target = $region17
    $region16: #{tpu_custom_call.1} parent=1 // pred_region
      %49 = vst [vmem:[#allocation5] sm:$0x1] 0.0
      %50 = vst [vmem:[#allocation6] sm:$0x1] 0.0
    $region17: #{tpu_custom_call.1} parent=1 // pred_fallthru
      _
    %v51 = vld [vmem:[#allocation2] sm:$0xff]
    %v52 = vld [vmem:[%s43] sm:$0x1]
    %vm53 = vcmp.ne.s32.totalorder %v52, 4294967196
    %v54 = vsel %vm53, %v52, 0
    %v55 = vlaneseq
    %v56 = vshrl.u32 %v55, 7
    %v57 = vlaneseq
    %v58 = vshrl.u32 %v57, 7
    %v59 = vsub.s32 0, %v58
    %v60 = vrot.slane %v54, %v59
    %vm61 = vcmp.eq.s32.totalorder %v56, %v60
    %v62 = vsel %vm61, 1, 0
    %v63 = vcvt.s32.f32 %v62
    %v64 = vrot.slane %v51, 4
    %v65 = vmax.f32 %v51, %v64
    %v66 = vrot.slane %v65, 2
    %v67 = vmax.f32 %v65, %v66
    %v68 = vrot.slane %v67, 1
    %v69 = vmax.f32 %v67, %v68
    %v70 = vsub.f32 %v51, %v69
    %v71 = vmul.f32 %v70, 1.442695
    %v72 = vpow.pop %v71
    %v73 = vrot.slane %v72, 4
    %v74 = vadd.f32 %v72, %v73
    %v75 = vrot.slane %v74, 2
    %v76 = vadd.f32 %v74, %v75
    %v77 = vrot.slane %v76, 1
    %v78 = vadd.f32 %v76, %v77
    %v79 = vmul.f32 %v51, %v63
    %v80 = vrot.slane %v79, 4
    %v81 = vadd.f32 %v79, %v80
    %v82 = vrot.slane %v81, 2
    %v83 = vadd.f32 %v81, %v82
    %v84 = vrot.slane %v83, 1
    %v85 = vadd.f32 %v83, %v84
    %v86 = vsub.f32 %v85, %v69
    %v87 = vlog2.pop %v78
    %v88 = vmul.f32 %v87, 0.6931472
    %v89 = vsub.f32 %v86, %v88
    %v90 = vmul.f32 %v89, 0.7
    %v91 = vmul.f32 %v90, 1.442695
    %v92 = vpow.pop %v91
    %v93 = vsub.f32 1.0, %v92
    %v94 = vmul.f32 %v93, 1.4285715
    %v95 = vsel %vm53, %v94, 0.0
    %v96 = vld [vmem:[#allocation5] sm:$0x1]
    %vm97 = vcmask 1040384
    %v98 = vsel %vm97, %v95, 0.0
    %99 = vadd.xlane.f32.xlu0 %v98
    %v100 = vpop.xlane.xlu0 %99
    %v101 = vrot.slane %v100, 4
    %v102 = vadd.f32 %v100, %v101
    %v103 = vrot.slane %v102, 2
    %v104 = vadd.f32 %v102, %v103
    %v105 = vrot.slane %v104, 1
    %v106 = vadd.f32 %v104, %v105
    %s107 = vtos %v106
    %v108 = vstv %s107
    %v109 = vadd.f32 %v96, %v108
    %110 = vst [vmem:[#allocation5] sm:$0x1] %v109
    %v111 = vld [vmem:[#allocation6] sm:$0x1]
    %v112 = vsel %vm53, 1, 0
    %v113 = vcvt.s32.f32 %v112
    %v114 = vsel %vm97, %v113, 0.0
    %115 = vadd.xlane.f32.xlu0 %v114
    %v116 = vpop.xlane.xlu0 %115
    %v117 = vrot.slane %v116, 4
    %v118 = vadd.f32 %v116, %v117
    %v119 = vrot.slane %v118, 2
    %v120 = vadd.f32 %v118, %v119
    %v121 = vrot.slane %v120, 1
    %v122 = vadd.f32 %v120, %v121
    %s123 = vtos %v122
    %v124 = vstv %s123
    %v125 = vadd.f32 %v111, %v124
    %126 = vst [vmem:[#allocation6] sm:$0x1] %v125
    // Predicated region
    $region18: #{tpu_custom_call.1} parent=1 // pred_check
      _
    $region19: #{tpu_custom_call.1} parent=1 // pred_check_branch
      %128 = sbr.rel (0) target = $region21
    $region20: #{tpu_custom_call.1} parent=1 // pred_region
      %s130 = ssub.s32 16, 16
      %131 = vsyncadd [#allocation4], %s130
      %s133 = sshll.u32 [#allocation5], 4
      %s134 = int_to_ptr.vmem [resolvable:$true] %s133
      %136 = dma.vmem_to_hbm [thread:$0]  %s134, 16, %s2, [#allocation4]
    $region21: #{tpu_custom_call.1} parent=1 // pred_fallthru
      _
    // Predicated region
    $region22: #{tpu_custom_call.1} parent=1 // pred_check
      _
    $region23: #{tpu_custom_call.1} parent=1 // pred_check_branch
      %138 = sbr.rel (0) target = $region25
    $region24: #{tpu_custom_call.1} parent=1 // pred_region
      %s140 = ssub.s32 16, 16
      %141 = vsyncadd [#allocation7], %s140
      %s143 = sshll.u32 [#allocation6], 4
      %s144 = int_to_ptr.vmem [resolvable:$true] %s143
      %146 = dma.vmem_to_hbm [thread:$0]  %s144, 16, %s3, [#allocation7]
    $region25: #{tpu_custom_call.1} parent=1 // pred_fallthru
      _
    // Predicated region
    $region26: #{tpu_custom_call.1} parent=1 // pred_check
      _
    $region27: #{tpu_custom_call.1} parent=1 // pred_check_branch
      %148 = sbr.rel (0) target = $region29
    $region28: #{tpu_custom_call.1} parent=1 // pred_region
      %149 = dma.done [#allocation4], 16
    $region29: #{tpu_custom_call.1} parent=1 // pred_fallthru
      _
    // Predicated region
    $region30: #{tpu_custom_call.1} parent=1 // pred_check
      _
    $region31: #{tpu_custom_call.1} parent=1 // pred_check_branch
      %151 = sbr.rel (0) target = $region33
    $region32: #{tpu_custom_call.1} parent=1 // pred_region
      %152 = dma.done [#allocation7], 16
    $region33: #{tpu_custom_call.1} parent=1 // pred_fallthru
      _
    %153 = vsyncpa [#allocation3], 1
    %154 = vsyncpa [#allocation4], 1
    %155 = vsyncpa [#allocation7], 1

</llo_original>
